<compile_context>
chip_gen: v5e
topology: v5e:2x2
jax: 0.10.0
libtpu: 0.0.40
codegen_flags: <defaults>
</compile_context>

<pallas_src>
import math
import functools

import jax
import jax.numpy as jnp
from jax import lax
from jax.experimental import pallas as pl
from jax.experimental.pallas import tpu as pltpu


# ---------------------------------------------------------------------------
# small helpers
# ---------------------------------------------------------------------------
def _pick_tile(n, max_tile):
    """Row-tile for a cdiv grid: full dim if it fits, else max_tile (mult of 8)."""
    assert max_tile % 8 == 0
    return n if n <= max_tile else max_tile


def _vmem_limit_bytes():
    # ~3/4 of physical VMEM: 96 MiB on v5e/v6e (128 MiB), 48 MiB on v7x (64 MiB).
    cap = 128 * 1024 * 1024
    try:
        cap = int(getattr(pltpu.get_tpu_info(), "vmem_capacity_bytes", cap))
    except Exception:
        pass
    return int(min(96 * 1024 * 1024, max(32 * 1024 * 1024, (cap * 3) // 4)))


def _compiler_params(dimension_semantics):
    # Mosaic-only hints; skip if the kernel is ever interpreted off-TPU.
    if jax.default_backend() != "tpu":
        return None
    return pltpu.CompilerParams(
        dimension_semantics=dimension_semantics,
        vmem_limit_bytes=_vmem_limit_bytes(),
    )


def _dropout(y, seed_ref, *, salt, row_offset, p, training):
    """Inverted dropout on a 2-D tile (keep prob 1-p, scale 1/(1-p)).

    Keep mask = integer hash of the GLOBAL element index (row_offset carries the
    tile's global row), so the mask is independent of the tiling and never
    repeats across grid tiles.  Matches torch.nn.Dropout semantics, not its RNG.
    """
    if (not training) or p <= 0.0:
        return y
    if p >= 1.0:                      # torch zeroes the output when p == 1
        return jnp.zeros_like(y)
    rows, cols = y.shape
    r = lax.broadcasted_iota(jnp.int32, (rows, cols), 0) + row_offset
    c = lax.broadcasted_iota(jnp.int32, (rows, cols), 1)
    h = r * jnp.int32(cols) + c
    h = h + (seed_ref[0] + jnp.int32(salt)) * jnp.int32(-1640531527)   # 0x9E3779B9
    # murmur3-style finalizer; int32 wraps like uint32, shifts are logical.
    h = h ^ lax.shift_right_logical(h, jnp.int32(16))
    h = h * jnp.int32(-2048144789)                                     # 0x85EBCA6B
    h = h ^ lax.shift_right_logical(h, jnp.int32(13))
    h = h * jnp.int32(-1028477387)                                     # 0xC2B2AE35
    h = h ^ lax.shift_right_logical(h, jnp.int32(16))
    bits = h & jnp.int32(0x7FFFFFFF)                  # uniform in [0, 2^31)
    threshold = jnp.int32(min(int(round(p * float(1 << 31))), (1 << 31) - 1))
    keep = bits >= threshold                          # P(keep) = 1 - p
    scale = jnp.asarray(1.0 / (1.0 - p), y.dtype)
    return jnp.where(keep, y * scale, jnp.zeros_like(y))


def make_positional_encoding(d_model, max_len=5000, dtype=jnp.float32):
    """Same buffer as torch PositionalEncoding.__init__, stored as (max_len, D)."""
    position = jnp.arange(max_len, dtype=jnp.float32)[:, None]
    div_term = jnp.exp(jnp.arange(0, d_model, 2, dtype=jnp.float32)
                       * (-math.log(10000.0) / d_model))
    pe = jnp.zeros((max_len, d_model), dtype=jnp.float32)
    pe = pe.at[:, 0::2].set(jnp.sin(position * div_term))
    pe = pe.at[:, 1::2].set(jnp.cos(position * div_term))
    return pe.astype(dtype)


# ---------------------------------------------------------------------------
# kernel 1: fused embedding-scale + positional encoding + dropout
# ---------------------------------------------------------------------------
def _pos_encoding_kernel(seed_ref, x_ref, pe_ref, o_ref, *,
                         scale, p, training, seq_len, seq_tile):
    # x_ref : (1, tS, D)  one batch element, one sequence tile (lane axis = D)
    # pe_ref: (tS, D)     index_map depends only on the seq grid axis -> reused
    s = pl.program_id(0)
    b = pl.program_id(1)
    y = x_ref[0, :, :] * scale + pe_ref[...]
    row_offset = b * seq_len + s * seq_tile           # global (batch, position) row
    y = _dropout(y, seed_ref, salt=0x11, row_offset=row_offset, p=p, training=training)
    o_ref[0, :, :] = y.astype(o_ref.dtype)


def positional_encoding(x, pe, seed, *, scale=1.0, p=0.1, training=True):
    """x: (B, S, D) batch-major activations; pe: (max_len, D); seed: (1,) int32."""
    B, S, D = x.shape
    pe_s = pe[:S]
    tS = _pick_tile(S, 512)
    kernel = functools.partial(_pos_encoding_kernel, scale=scale, p=p,
                               training=training, seq_len=S, seq_tile=tS)
    return pl.pallas_call(
        kernel,
        out_shape=jax.ShapeDtypeStruct((B, S, D), x.dtype),
        grid=(pl.cdiv(S, tS), B),           # batch innermost -> pe tile not re-DMAed
        in_specs=[
            pl.BlockSpec(memory_space=pltpu.MemorySpace.SMEM),      # seed scalar
            pl.BlockSpec((1, tS, D), lambda s, b: (b, s, 0)),       # x tile
            pl.BlockSpec((tS, D), lambda s, b: (s, 0)),             # pe (seq-only map)
        ],
        out_specs=pl.BlockSpec((1, tS, D), lambda s, b: (b, s, 0)),
        compiler_params=_compiler_params(("parallel", "parallel")),
    )(seed, x, pe_s)


# ---------------------------------------------------------------------------
# kernel 2: generic linear (matmul + bias), tiled over rows AND output columns
# (used for the QKV projection and the vocab decoder)
# ---------------------------------------------------------------------------
def _linear_kernel(x_ref, w_ref, b_ref, o_ref):
    y = jnp.dot(x_ref[...], w_ref[...], preferred_element_type=jnp.float32)
    o_ref[...] = (y + b_ref[...]).astype(o_ref.dtype)


def linear(x, w, b, *, max_rows=512, max_cols=2048):
    """x: (R, K); w: (K, N) pre-transposed; b: (N,)."""
    R, K = x.shape
    N = w.shape[1]
    tR = _pick_tile(R, max_rows)
    tN = N if N <= max_cols else max_cols            # 2048 is a multiple of 128
    return pl.pallas_call(
        _linear_kernel,
        out_shape=jax.ShapeDtypeStruct((R, N), x.dtype),
        grid=(pl.cdiv(R, tR), pl.cdiv(N, tN)),
        in_specs=[
            pl.BlockSpec((tR, K), lambda i, j: (i, 0)),
            pl.BlockSpec((K, tN), lambda i, j: (0, j)),   # resident when N fits a tile
            pl.BlockSpec((1, tN), lambda i, j: (0, j)),
        ],
        out_specs=pl.BlockSpec((tR, tN), lambda i, j: (i, j)),
        compiler_params=_compiler_params(("parallel", "parallel")),
    )(x, w, b.reshape(1, N))


# ---------------------------------------------------------------------------
# kernel 3: per-batch attention in (S, 3D) layout: heads looped in-kernel,
# scores + mask + softmax (+ attn dropout) + context, lane-dense (S, D) store
# ---------------------------------------------------------------------------
def _attention_kernel(seed_ref, qkv_ref, mask_ref, o_ref, *,
                      nhead, d_model, sm_scale, p, training, seq_len, salt):
    b = pl.program_id(0)
    qkv = qkv_ref[0, :, :]                 # (S, 3D): [q | k | v] along features
    dh = d_model // nhead
    ctx_heads = []
    for h in range(nhead):                 # static Python loop, static lane slices
        q = qkv[:, h * dh:(h + 1) * dh]
        k = qkv[:, d_model + h * dh:d_model + (h + 1) * dh]
        v = qkv[:, 2 * d_model + h * dh:2 * d_model + (h + 1) * dh]
        scores = lax.dot_general(q, k, (((1,), (1,)), ((), ())),
                                 preferred_element_type=jnp.float32)
        scores = scores * sm_scale + mask_ref[...]
        m = jnp.max(scores, axis=-1, keepdims=True)
        e = jnp.exp(scores - m)
        attn = e / jnp.sum(e, axis=-1, keepdims=True)
        attn = _dropout(attn, seed_ref, salt=salt,
                        row_offset=(b * nhead + h) * seq_len, p=p, training=training)
        ctx_heads.append(jnp.dot(attn.astype(v.dtype), v,
                                 preferred_element_type=jnp.float32))
    # one lane-dense (S, D) store instead of per-head (S, Dh) masked partial stores
    o_ref[0, :, :] = jnp.concatenate(ctx_heads, axis=-1).astype(o_ref.dtype)


def attention(qkv, mask, seed, *, nhead, p=0.0, training=False, salt=0):
    """qkv: (B, S, 3D) concatenated projections; mask: (S, S) additive float mask."""
    # TODO(synk): flash-style online-softmax KV tiling for long sequences; the
    # whole-row (S, S) score block is fine at demo S and keeps everything fused.
    B, S, D3 = qkv.shape
    D = D3 // 3
    kernel = functools.partial(_attention_kernel, nhead=nhead, d_model=D,
                               sm_scale=1.0 / math.sqrt(D // nhead), p=p,
                               training=training, seq_len=S, salt=salt)
    return pl.pallas_call(
        kernel,
        out_shape=jax.ShapeDtypeStruct((B, S, D), qkv.dtype),
        grid=(B,),
        in_specs=[
            pl.BlockSpec(memory_space=pltpu.MemorySpace.SMEM),
            pl.BlockSpec((1, S, D3), lambda b: (b, 0, 0)),  # qkv tile reused by all heads
            pl.BlockSpec((S, S), lambda b: (0, 0)),         # mask resident
        ],
        out_specs=pl.BlockSpec((1, S, D), lambda b: (b, 0, 0)),
        compiler_params=_compiler_params(("parallel",)),
    )(seed, qkv, mask)


# ---------------------------------------------------------------------------
# kernel 4: fused out-projection + dropout + residual add + LayerNorm
# ---------------------------------------------------------------------------
def _proj_residual_ln_kernel(seed_ref, x_ref, res_ref, w_ref, b_ref, g_ref, bb_ref,
                             o_ref, *, p, training, salt, eps, row_tile):
    y = jnp.dot(x_ref[...], w_ref[...], preferred_element_type=jnp.float32)
    y = y + b_ref[...]
    y = _dropout(y, seed_ref, salt=salt, row_offset=pl.program_id(0) * row_tile,
                 p=p, training=training)
    z = res_ref[...].astype(jnp.float32) + y
    mean = jnp.mean(z, axis=-1, keepdims=True)
    zc = z - mean
    var = jnp.mean(zc * zc, axis=-1, keepdims=True)
    inv = lax.rsqrt(var + eps)
    o_ref[...] = (zc * inv * g_ref[...] + bb_ref[...]).astype(o_ref.dtype)


def proj_residual_layernorm(x, res, w, b, gamma, beta, seed, *, p=0.0,
                            training=False, salt=0, eps=1e-5, max_rows=512):
    R, K = x.shape
    D = w.shape[1]
    tR = _pick_tile(R, max_rows)
    kernel = functools.partial(_proj_residual_ln_kernel, p=p, training=training,
                               salt=salt, eps=eps, row_tile=tR)
    row_in = pl.BlockSpec((tR, K), lambda i: (i, 0))
    row_res = pl.BlockSpec((tR, D), lambda i: (i, 0))
    vec = pl.BlockSpec((1, D), lambda i: (0, 0))
    return pl.pallas_call(
        kernel,
        out_shape=jax.ShapeDtypeStruct((R, D), x.dtype),
        grid=(pl.cdiv(R, tR),),
        in_specs=[
            pl.BlockSpec(memory_space=pltpu.MemorySpace.SMEM),
            row_in, row_res,
            pl.BlockSpec((K, D), lambda i: (0, 0)),          # weight resident
            vec, vec, vec,
        ],
        out_specs=row_res,
        compiler_params=_compiler_params(("parallel",)),
    )(seed, x, res, w, b.reshape(1, D), gamma.reshape(1, D), beta.reshape(1, D))


# ---------------------------------------------------------------------------
# kernel 5: fused FFN (linear1 + ReLU + dropout + linear2 + dropout) +
# residual add + LayerNorm -- the (R, d_hid) intermediate never touches HBM
# ---------------------------------------------------------------------------
def _ffn_residual_ln_kernel(seed_ref, x_ref, w1_ref, b1_ref, w2_ref, b2_ref,
                            g_ref, bb_ref, o_ref, *, p, training, salt1, salt2,
                            eps, row_tile):
    x = x_ref[...]
    row_off = pl.program_id(0) * row_tile
    h = jnp.dot(x, w1_ref[...], preferred_element_type=jnp.float32) + b1_ref[...]
    h = jnp.maximum(h, 0.0)
    h = _dropout(h, seed_ref, salt=salt1, row_offset=row_off, p=p, training=training)
    y = jnp.dot(h.astype(w2_ref.dtype), w2_ref[...],
                preferred_element_type=jnp.float32) + b2_ref[...]
    y = _dropout(y, seed_ref, salt=salt2, row_offset=row_off, p=p, training=training)
    z = x.astype(jnp.float32) + y
    mean = jnp.mean(z, axis=-1, keepdims=True)
    zc = z - mean
    var = jnp.mean(zc * zc, axis=-1, keepdims=True)
    inv = lax.rsqrt(var + eps)
    o_ref[...] = (zc * inv * g_ref[...] + bb_ref[...]).astype(o_ref.dtype)


def ffn_residual_layernorm(x, w1, b1, w2, b2, gamma, beta, seed, *, p=0.0,
                           training=False, salt1=0, salt2=1, eps=1e-5, max_rows=256):
    R, D = x.shape
    H = w1.shape[1]
    tR = _pick_tile(R, max_rows)
    kernel = functools.partial(_ffn_residual_ln_kernel, p=p, training=training,
                               salt1=salt1, salt2=salt2, eps=eps, row_tile=tR)
    row_spec = pl.BlockSpec((tR, D), lambda i: (i, 0))
    vec_d = pl.BlockSpec((1, D), lambda i: (0, 0))
    return pl.pallas_call(
        kernel,
        out_shape=jax.ShapeDtypeStruct((R, D), x.dtype),
        grid=(pl.cdiv(R, tR),),
        in_specs=[
            pl.BlockSpec(memory_space=pltpu.MemorySpace.SMEM),
            row_spec,
            pl.BlockSpec((D, H), lambda i: (0, 0)),          # ff1 weight resident
            pl.BlockSpec((1, H), lambda i: (0, 0)),
            pl.BlockSpec((H, D), lambda i: (0, 0)),          # ff2 weight resident
            vec_d, vec_d, vec_d,
        ],
        out_specs=row_spec,
        compiler_params=_compiler_params(("parallel",)),
    )(seed, x, w1, b1.reshape(1, H), w2, b2.reshape(1, D),
      gamma.reshape(1, D), beta.reshape(1, D))


# ---------------------------------------------------------------------------
# model-level wrappers (glue in plain JAX; heavy math in the kernels above)
# ---------------------------------------------------------------------------
def encoder_layer_forward(x, lp, mask, seed, *, nhead, p, training, layer_idx):
    B, S, D = x.shape
    base = 16 * (layer_idx + 1)
    x2d = x.reshape(B * S, D)

    # --- self-attention block (post-norm, matches torch TransformerEncoderLayer) ---
    qkv = linear(x2d, lp["in_w"], lp["in_b"])                    # (B*S, 3D)
    ctx = attention(qkv.reshape(B, S, 3 * D), mask, seed, nhead=nhead,
                    p=p, training=training, salt=base + 1)       # (B, S, D)
    x2d = proj_residual_layernorm(ctx.reshape(B * S, D), x2d, lp["out_w"],
                                  lp["out_b"], lp["ln1_g"], lp["ln1_b"], seed,
                                  p=p, training=training, salt=base + 2)

    # --- feed-forward block, fully fused with residual + LayerNorm ---
    x2d = ffn_residual_layernorm(x2d, lp["ff1_w"], lp["ff1_b"], lp["ff2_w"],
                                 lp["ff2_b"], lp["ln2_g"], lp["ln2_b"], seed,
                                 p=p, training=training,
                                 salt1=base + 3, salt2=base + 4)
    return x2d.reshape(B, S, D)


def transformer_forward(params, src, src_mask, seed, *, nhead, dropout_p, training):
    """src: (S, B) int32 tokens; src_mask: (S, S) additive float mask.
    Returns logits (S, B, ntoken), matching the torch module's forward."""
    S, B = src.shape
    D = params["emb"].shape[1]
    # TODO(synk): nn.Embedding's token gather is data-dependent; kept in plain JAX.
    # Gather directly in batch-major order -> no extra (S,B,D)->(B,S,D) HBM pass.
    x = params["emb"][src.T]                     # (B, S, D), lane-dense
    x = positional_encoding(x, params["pe"], seed, scale=math.sqrt(D),
                            p=dropout_p, training=training)
    for li, lp in enumerate(params["layers"]):
        x = encoder_layer_forward(x, lp, src_mask, seed, nhead=nhead,
                                  p=dropout_p, training=training, layer_idx=li)
    logits = linear(x.reshape(B * S, D), params["dec_w"], params["dec_b"])
    ntoken = logits.shape[-1]
    return jnp.transpose(logits.reshape(B, S, ntoken), (1, 0, 2))


def init_params(key, *, ntoken, d_model, nhead, d_hid, nlayers, max_len=5000):
    """All linear weights are stored pre-transposed as (in_features, out_features)."""
    initrange = 0.1
    keys = jax.random.split(key, 2 + 6 * nlayers)

    def u(k, shape, scale):
        return jax.random.uniform(k, shape, jnp.float32, -scale, scale)

    params = {
        "emb": u(keys[0], (ntoken, d_model), initrange),
        "pe": make_positional_encoding(d_model, max_len),
        "dec_w": u(keys[1], (d_model, ntoken), initrange),
        "dec_b": jnp.zeros((ntoken,), jnp.float32),
        "layers": [],
    }
    ki = 2
    s_in, s_ff = 1.0 / math.sqrt(d_model), 1.0 / math.sqrt(d_hid)
    for _ in range(nlayers):
        params["layers"].append({
            "in_w": u(keys[ki + 0], (d_model, 3 * d_model), s_in),
            "in_b": jnp.zeros((3 * d_model,), jnp.float32),
            "out_w": u(keys[ki + 1], (d_model, d_model), s_in),
            "out_b": jnp.zeros((d_model,), jnp.float32),
            "ff1_w": u(keys[ki + 2], (d_model, d_hid), s_in),
            "ff1_b": u(keys[ki + 3], (d_hid,), s_in),
            "ff2_w": u(keys[ki + 4], (d_hid, d_model), s_ff),
            "ff2_b": u(keys[ki + 5], (d_model,), s_ff),
            "ln1_g": jnp.ones((d_model,), jnp.float32),
            "ln1_b": jnp.zeros((d_model,), jnp.float32),
            "ln2_g": jnp.ones((d_model,), jnp.float32),
            "ln2_b": jnp.zeros((d_model,), jnp.float32),
        })
        ki += 6
    return params


# ---------------------------------------------------------------------------
# pure-JAX reference (eval mode) for correctness checking
# ---------------------------------------------------------------------------
def _ref_layernorm(x, g, b, eps=1e-5):
    mean = jnp.mean(x, axis=-1, keepdims=True)
    var = jnp.mean((x - mean) ** 2, axis=-1, keepdims=True)
    return (x - mean) * lax.rsqrt(var + eps) * g + b


def reference_forward(params, src, src_mask, *, nhead):
    S, B = src.shape
    D = params["emb"].shape[1]
    Dh = D // nhead
    x = params["emb"][src] * math.sqrt(D)          # (S, B, D)
    x = x + params["pe"][:S][:, None, :]
    for lp in params["layers"]:
        qkv = x @ lp["in_w"] + lp["in_b"]          # (S, B, 3D)
        q, k, v = jnp.split(qkv, 3, axis=-1)

        def heads(t):
            return jnp.transpose(t.reshape(S, B, nhead, Dh), (1, 2, 0, 3))

        qh, kh, vh = heads(q), heads(k), heads(v)
        scores = jnp.einsum("bhsd,bhtd->bhst", qh, kh) / math.sqrt(Dh) + src_mask
        attn = jax.nn.softmax(scores, axis=-1)
        ctx = jnp.einsum("bhst,bhtd->bhsd", attn, vh)
        ctx = jnp.transpose(ctx, (2, 0, 1, 3)).reshape(S, B, D)
        x = _ref_layernorm(x + ctx @ lp["out_w"] + lp["out_b"],
                           lp["ln1_g"], lp["ln1_b"])
        ff = jnp.maximum(x @ lp["ff1_w"] + lp["ff1_b"], 0.0)
        ff = ff @ lp["ff2_w"] + lp["ff2_b"]
        x = _ref_layernorm(x + ff, lp["ln2_g"], lp["ln2_b"])
    return x @ params["dec_w"] + params["dec_b"]


if __name__ == "__main__":
    seq_len, batch = 8, 2
    d_model, nhead, d_hid, nlayers, ntoken = 32, 2, 64, 2, 33
    dropout_p = 0.2

    root = jax.random.PRNGKey(0)
    kp, ks = jax.random.split(root)
    params = init_params(kp, ntoken=ntoken, d_model=d_model, nhead=nhead,
                         d_hid=d_hid, nlayers=nlayers)
    src = jax.random.randint(ks, (seq_len, batch), 0, ntoken, dtype=jnp.int32)
    # causal mask (as in the torch tutorial usage): -inf above the diagonal
    src_mask = jnp.where(jnp.arange(seq_len)[None, :] > jnp.arange(seq_len)[:, None],
                         jnp.float32(-jnp.inf), jnp.float32(0.0))
    seed = jnp.array([1234], dtype=jnp.int32)   # vary per training step for new masks

    # training-mode forward (exercises all in-kernel dropout paths)
    out_train = transformer_forward(params, src, src_mask, seed, nhead=nhead,
                                    dropout_p=dropout_p, training=True)
    out_train = jax.block_until_ready(out_train)
    assert out_train.shape == (seq_len, batch, ntoken)

    # eval-mode forward vs. pure-JAX reference (loose tol for MXU f32 matmuls)
    out_eval = transformer_forward(params, src, src_mask, seed, nhead=nhead,
                                   dropout_p=dropout_p, training=False)
    out_eval = jax.block_until_ready(out_eval)
    ref = reference_forward(params, src, src_mask, nhead=nhead)
    assert out_eval.shape == ref.shape
    assert jnp.allclose(out_eval, ref, rtol=2e-2, atol=2e-2), \
        float(jnp.max(jnp.abs(out_eval - ref)))

    # tight check on the positional-encoding kernel itself (no matmul involved)
    x_bsd = params["emb"][src.T]
    pos = positional_encoding(x_bsd, params["pe"], seed, scale=math.sqrt(d_model),
                              p=dropout_p, training=False)
    pos_ref = x_bsd * math.sqrt(d_model) + params["pe"][:seq_len][None, :, :]
    assert jnp.allclose(jax.block_until_ready(pos), pos_ref, atol=1e-5)

    print("KERNEL_OK")
</pallas_src>

<mosaic_0001>
module attributes {stable_mosaic.version = 11 : i64} {
  func.func @_pos_encoding_kernel(%arg0: i32, %arg1: i32, %arg2: memref<1xi32, #tpu.memory_space<smem>>, %arg3: memref<1x8x32xf32, #tpu.memory_space<vmem>>, %arg4: memref<8x32xf32, #tpu.memory_space<vmem>>, %arg5: memref<1x8x32xf32, #tpu.memory_space<vmem>>) attributes {dimension_semantics = [#tpu.dimension_semantics<arbitrary>, #tpu.dimension_semantics<arbitrary>], iteration_bounds = array<i64: 1, 2>, scalar_prefetch = 0 : i64, scratch_operands = 0 : i64, tpu.core_type = #tpu.core_type<tc>, window_params = [{transform_indices = @transform_0, window_bounds = array<i64: 1>}, {transform_indices = @transform_1, window_bounds = array<i64: 1, 8, 32>}, {transform_indices = @transform_2, window_bounds = array<i64: 8, 32>}, {transform_indices = @transform_3, window_bounds = array<i64: 1, 8, 32>}]} {
    %c0 = arith.constant 0 : index
    %c0_0 = arith.constant 0 : index
    %c0_1 = arith.constant 0 : index
    %0 = vector.load %arg3[%c0, %c0_0, %c0_1] : memref<1x8x32xf32, #tpu.memory_space<vmem>>, vector<1x8x32xf32>
    %1 = vector.shape_cast %0 : vector<1x8x32xf32> to vector<8x32xf32>
    %cst = arith.constant 5.65685415 : f32
    %2 = vector.broadcast %cst : f32 to vector<8x32xf32>
    %3 = arith.mulf %1, %2 : vector<8x32xf32>
    %c0_2 = arith.constant 0 : index
    %c0_3 = arith.constant 0 : index
    %4 = vector.load %arg4[%c0_2, %c0_3] : memref<8x32xf32, #tpu.memory_space<vmem>>, vector<8x32xf32>
    %5 = arith.addf %3, %4 : vector<8x32xf32>
    %c8_i32 = arith.constant 8 : i32
    %6 = arith.muli %arg1, %c8_i32 : i32
    %c8_i32_4 = arith.constant 8 : i32
    %7 = arith.muli %arg0, %c8_i32_4 : i32
    %8 = arith.addi %6, %7 : i32
    %9 = tpu.iota {dimensions = array<i32: 0>} : vector<8x32xi32>
    %10 = vector.broadcast %8 : i32 to vector<8x32xi32>
    %11 = arith.addi %9, %10 : vector<8x32xi32>
    %12 = tpu.iota {dimensions = array<i32: 1>} : vector<8x32xi32>
    %c32_i32 = arith.constant 32 : i32
    %13 = vector.broadcast %c32_i32 : i32 to vector<8x32xi32>
    %14 = arith.muli %11, %13 : vector<8x32xi32>
    %15 = arith.addi %14, %12 : vector<8x32xi32>
    %c0_5 = arith.constant 0 : index
    %16 = memref.load %arg2[%c0_5] : memref<1xi32, #tpu.memory_space<smem>>
    %c17_i32 = arith.constant 17 : i32
    %17 = arith.addi %16, %c17_i32 : i32
    %c-1640531527_i32 = arith.constant -1640531527 : i32
    %18 = arith.muli %17, %c-1640531527_i32 : i32
    %19 = vector.broadcast %18 : i32 to vector<8x32xi32>
    %20 = arith.addi %15, %19 : vector<8x32xi32>
    %c16_i32 = arith.constant 16 : i32
    %21 = vector.broadcast %c16_i32 : i32 to vector<8x32xi32>
    %22 = arith.shrui %20, %21 : vector<8x32xi32>
    %23 = arith.xori %20, %22 : vector<8x32xi32>
    %c-2048144789_i32 = arith.constant -2048144789 : i32
    %24 = vector.broadcast %c-2048144789_i32 : i32 to vector<8x32xi32>
    %25 = arith.muli %23, %24 : vector<8x32xi32>
    %c13_i32 = arith.constant 13 : i32
    %26 = vector.broadcast %c13_i32 : i32 to vector<8x32xi32>
    %27 = arith.shrui %25, %26 : vector<8x32xi32>
    %28 = arith.xori %25, %27 : vector<8x32xi32>
    %c-1028477387_i32 = arith.constant -1028477387 : i32
    %29 = vector.broadcast %c-1028477387_i32 : i32 to vector<8x32xi32>
    %30 = arith.muli %28, %29 : vector<8x32xi32>
    %c16_i32_6 = arith.constant 16 : i32
    %31 = vector.broadcast %c16_i32_6 : i32 to vector<8x32xi32>
    %32 = arith.shrui %30, %31 : vector<8x32xi32>
    %33 = arith.xori %30, %32 : vector<8x32xi32>
    %c2147483647_i32 = arith.constant 2147483647 : i32
    %34 = vector.broadcast %c2147483647_i32 : i32 to vector<8x32xi32>
    %35 = arith.andi %33, %34 : vector<8x32xi32>
    %c429496730_i32 = arith.constant 429496730 : i32
    %36 = vector.broadcast %c429496730_i32 : i32 to vector<8x32xi32>
    %37 = arith.cmpi sge, %35, %36 : vector<8x32xi32>
    %cst_7 = arith.constant 1.250000e+00 : f32
    %38 = vector.broadcast %cst_7 : f32 to vector<8x32xf32>
    %39 = arith.mulf %5, %38 : vector<8x32xf32>
    %cst_8 = arith.constant 0.000000e+00 : f32
    %40 = vector.broadcast %cst_8 : f32 to vector<8x32xf32>
    %41 = arith.select %37, %39, %40 : vector<8x32xi1>, vector<8x32xf32>
    %c0_9 = arith.constant 0 : index
    %c0_10 = arith.constant 0 : index
    %c0_11 = arith.constant 0 : index
    %42 = vector.load %arg5[%c0_9, %c0_10, %c0_11] : memref<1x8x32xf32, #tpu.memory_space<vmem>>, vector<1x8x32xf32>
    %43 = vector.shape_cast %42 : vector<1x8x32xf32> to vector<8x32xf32>
    %44 = vector.shape_cast %41 : vector<8x32xf32> to vector<1x8x32xf32>
    tpu.vector_store %arg5[%c0_9, %c0_10, %c0_11], %44 {strides = array<i32>} : memref<1x8x32xf32, #tpu.memory_space<vmem>>, vector<1x8x32xf32>,
    return
  }
  func.func @transform_0(%arg0: i32, %arg1: i32) -> i32 {
    %c0_i32 = arith.constant 0 : i32
    %c0_i32_0 = arith.constant 0 : i32
    return %c0_i32 : i32
  }
  func.func @transform_1(%arg0: i32, %arg1: i32) -> (i32, i32, i32) {
    %c0_i32 = arith.constant 0 : i32
    %c0_i32_0 = arith.constant 0 : i32
    return %arg1, %arg0, %c0_i32 : i32, i32, i32
  }
  func.func @transform_2(%arg0: i32, %arg1: i32) -> (i32, i32) {
    %c0_i32 = arith.constant 0 : i32
    %c0_i32_0 = arith.constant 0 : i32
    return %arg0, %c0_i32 : i32, i32
  }
  func.func @transform_3(%arg0: i32, %arg1: i32) -> (i32, i32, i32) {
    %c0_i32 = arith.constant 0 : i32
    %c0_i32_0 = arith.constant 0 : i32
    return %arg1, %arg0, %c0_i32 : i32, i32, i32
  }
}

</mosaic_0001>

<llo_original>
// kernel: tpu_custom_call.1
$region0: #{tpu_custom_call.1}
  #allocation0 [shape = 'u32[]', space=smem, size = 0x4, offset = 0x4, fixed_abs, tag = 'smem constant byte address 0x4 - core index']
  #allocation1 [shape = 'u32[72,128]{1,0:T(1,128)}', space=vmem, size = 0x9000, scoped, tag = 'internal scratch']
  #allocation2 [shape = 's32[1]{0:T(128)S(6)}', space=smem, size = 0x200, scoped, tag = 'scoped memory for tpu_custom_call.1']
  %s0 = inlined_call_operand.<no memory space> [shape: s32[1], index: 0, kind: input, shape index: {}]
  %s1 = inlined_call_operand.hbm [shape: f32[2,8,32], index: 1, kind: input, shape index: {}]
  %s2 = inlined_call_operand.hbm [shape: f32[8,32], index: 2, kind: input, shape index: {}]
  %s3 = inlined_call_operand.hbm [shape: f32[2,8,32], index: 3, kind: output, shape index: {}]
  %s4 = sld [smem:[#allocation0]]
  $region53: #{tpu_custom_call.1} parent=0
    _
  %s6 = ssub.s32 1, %s4
  %s7 = scalar_select 0, %s6, %s4
  %8 = sst [smem:[#allocation2]] %s0
  $region1: #{tpu_custom_call.1} parent=0
    #allocation3 [shape = 'u8[8192]{0}', space=vmem, size = 0x2000, scoped, tag = 'input window, operand 1']
    #allocation4 [shape = 's32[2]{0}', space=sflag, size = 0x8, scoped, tag = 'scoped memory for tpu_custom_call.1']
    #allocation5 [shape = 's32[2]{0}', space=sflag, size = 0x8, scoped, tag = 'scoped memory for tpu_custom_call.1']
    #allocation6 [shape = 'u8[4096]{0}', space=vmem, size = 0x1000, scoped, tag = 'input window, operand 2, single buffered']
    #allocation7 [shape = 's32[1]{0}', space=sflag, size = 0x4, scoped, tag = 'scoped memory for tpu_custom_call.1']
    #allocation8 [shape = 'u8[8192]{0}', space=vmem, size = 0x2000, scoped, tag = 'output window, operand 0']
    %9 = vsyncpa [#allocation4], 0
    %s10 = scalar_lea.sflag [#allocation4], 1
    %11 = vsyncpa %s10, 0
    %12 = vsyncpa [#allocation7], 0
    %13 = vsyncpa [#allocation5], 0
    %s14 = scalar_lea.sflag [#allocation5], 1
    %15 = vsyncpa %s14, 0
    loop: start=0, step=1, limit=4
    $region2: #{tpu_custom_call.1} parent=1 // loop_pre_header
      _
    $region3: #{tpu_custom_call.1} parent=1 // loop_header
      %s17 = sphi 0, %s21
      %p18 = scmp.ge.s32.totalorder %s17, 4
      %s24 = sphi 0, %s36
      %s25 = sphi 0, %s32
      %s26 = sphi 0, %s24
      %s27 = sphi 0, %s25
      %s28 = sphi 0, %s26
      %s29 = sphi 0, %s27
      %s37 = sphi 0, %s37
      %s39 = sphi 0, %s37
      %s40 = sphi 0, %s39
      %s54 = sphi 0, %s40
      %s62 = sphi 0, %s64
      %s65 = sphi 0, %s62
      %s66 = sphi 0, %s65
      %s82 = sphi 0, %s66
      %s88 = sphi 0, %s90
      %s91 = sphi 0, %s88
      %s92 = sphi 0, %s91
      %s108 = sphi 0, %s92
      %s116 = sphi 0, %s118
      %s119 = sphi 0, %s116
      %s120 = sphi 0, %s119
      %s136 = sphi 0, %s120
    $region4: #{tpu_custom_call.1} parent=1 // loop_header_branch
      %20 = sbr.rel (%p18) target = $region8
    $region5: #{tpu_custom_call.1} parent=1 // loop_body
      %s22 = ssub.s32 %s17, 1
      %s23 = ssub.s32 %s17, 2
      %s30 = sadd.s32 1, %s25
      %p31 = scmp.ge.s32.totalorder %s30, 2
      %s32 = scalar_select %p31, 0, %s30
      %s33 = sadd.s32 1, %s24
      %s34 = scalar_select %p31, %s33, %s24
      %p35 = scmp.ge.s32.totalorder %s34, 1
      %s36 = scalar_select %p35, 0, %s34
      %s38 = sadd.s32 %s37, 1
      %p41 = scmp.eq.s32.totalorder %s17, 1
      %p42 = scmp.ne.s32.totalorder %s37, %s39
      %p43 = scmp.eq.s32.totalorder %s17, 0
      %p44 = por %p42, %p43
      %p45 = scmp.ne.s32.totalorder %s37, %s39
      %p46 = scmp.eq.s32.totalorder %s22, 1
      %p47 = por %p45, %p46
      %p48 = scmp.ne.s32.totalorder %s39, %s40
      %p49 = scmp.eq.s32.totalorder %s22, 0
      %p50 = por %p48, %p49
      %p51 = scmp.ne.s32.totalorder %s39, %s40
      %p52 = scmp.eq.s32.totalorder %s23, 1
      %p53 = por %p51, %p52
      %p55 = scmp.ne.s32.totalorder %s40, %s54
      %p56 = scmp.eq.s32.totalorder %s23, 0
      %p57 = por %p55, %p56
      %s58 = ssub.s32 %s25, %s32
      %s59 = ssub.s32 %s24, %s36
      %s60 = sor.u32 %s58, %s59
      %p61 = scmp.eq.s32.totalorder %s60, 0
      %s63 = sadd.s32 %s62, 1
      %s64 = scalar_select %p61, %s62, %s63
      %p67 = pneg %p61
      %p68 = scmp.eq.s32.totalorder %s17, 1
      %p69 = por %p67, %p68
      %p70 = scmp.ne.s32.totalorder %s62, %s65
      %p71 = scmp.eq.s32.totalorder %s17, 0
      %p72 = por %p70, %p71
      %p73 = scmp.ne.s32.totalorder %s62, %s65
      %p74 = scmp.eq.s32.totalorder %s22, 1
      %p75 = por %p73, %p74
      %p76 = scmp.ne.s32.totalorder %s65, %s66
      %p77 = scmp.eq.s32.totalorder %s22, 0
      %p78 = por %p76, %p77
      %p79 = scmp.ne.s32.totalorder %s65, %s66
      %p80 = scmp.eq.s32.totalorder %s23, 1
      %p81 = por %p79, %p80
      %p83 = scmp.ne.s32.totalorder %s66, %s82
      %p84 = scmp.eq.s32.totalorder %s23, 0
      %p85 = por %p83, %p84
      %s86 = ssub.s32 %s24, %s36
      %p87 = scmp.eq.s32.totalorder %s86, 0
      %s89 = sadd.s32 %s88, 1
      %s90 = scalar_select %p87, %s88, %s89
      %p93 = pneg %p87
      %p94 = scmp.eq.s32.totalorder %s17, 1
      %p95 = por %p93, %p94
      %p96 = scmp.ne.s32.totalorder %s88, %s91
      %p97 = scmp.eq.s32.totalorder %s17, 0
      %p98 = por %p96, %p97
      %p99 = scmp.ne.s32.totalorder %s88, %s91
      %p100 = scmp.eq.s32.totalorder %s22, 1
      %p101 = por %p99, %p100
      %p102 = scmp.ne.s32.totalorder %s91, %s92
      %p103 = scmp.eq.s32.totalorder %s22, 0
      %p104 = por %p102, %p103
      %p105 = scmp.ne.s32.totalorder %s91, %s92
      %p106 = scmp.eq.s32.totalorder %s23, 1
      %p107 = por %p105, %p106
      %p109 = scmp.ne.s32.totalorder %s92, %s108
      %p110 = scmp.eq.s32.totalorder %s23, 0
      %p111 = por %p109, %p110
      %s112 = ssub.s32 %s25, %s32
      %s113 = ssub.s32 %s24, %s36
      %s114 = sor.u32 %s112, %s113
      %p115 = scmp.eq.s32.totalorder %s114, 0
      %s117 = sadd.s32 %s116, 1
      %s118 = scalar_select %p115, %s116, %s117
      %p121 = pneg %p115
      %p122 = scmp.eq.s32.totalorder %s17, 1
      %p123 = por %p121, %p122
      %p124 = scmp.ne.s32.totalorder %s116, %s119
      %p125 = scmp.eq.s32.totalorder %s17, 0
      %p126 = por %p124, %p125
      %p127 = scmp.ne.s32.totalorder %s116, %s119
      %p128 = scmp.eq.s32.totalorder %s22, 1
      %p129 = por %p127, %p128
      %p130 = scmp.ne.s32.totalorder %s119, %s120
      %p131 = scmp.eq.s32.totalorder %s22, 0
      %p132 = por %p130, %p131
      %p133 = scmp.ne.s32.totalorder %s119, %s120
      %p134 = scmp.eq.s32.totalorder %s23, 1
      %p135 = por %p133, %p134
      %p137 = scmp.ne.s32.totalorder %s120, %s136
      %p138 = scmp.eq.s32.totalorder %s23, 0
      %p139 = por %p137, %p138
      %p140 = scmp.le.s32.totalorder 1, %s17
      %p141 = scmp.lt.s32.totalorder %s17, 3
      %p142 = pnand %p140, %p141
      %p143 = pneg %p142
      // Predicated region
      $region9: #{tpu_custom_call.1} parent=5 // pred_check
        _
      $region10: #{tpu_custom_call.1} parent=5 // pred_check_branch
        %145 = sbr.rel (%p142) target = $region12
      $region11: #{tpu_custom_call.1} parent=5 // pred_region
        %s146 = ssub.s32 %s17, 1
        // Predicated region
        $region13: #{tpu_custom_call.1} parent=11 // pred_check
          %p147 = pneg %p50
        $region14: #{tpu_custom_call.1} parent=11 // pred_check_branch
          %149 = sbr.rel (%p147) target = $region16
        $region15: #{tpu_custom_call.1} parent=11 // pred_region
          _
        $region16: #{tpu_custom_call.1} parent=11 // pred_fallthru
          _
        // Predicated region
        $region17: #{tpu_custom_call.1} parent=11 // pred_check
          %p150 = pneg %p104
        $region18: #{tpu_custom_call.1} parent=11 // pred_check_branch
          %152 = sbr.rel (%p150) target = $region20
        $region19: #{tpu_custom_call.1} parent=11 // pred_region
          %154 = vsyncadd [#allocation7], 0
          %s155 = smul.addr %s26, 8
          %s156 = scalar_lea.hbm %s2, %s155
          %s158 = sshll.u32 %s156, 4
          %s159 = int_to_ptr.hbm [resolvable:$true] %s158
          %s160 = sshll.u32 [#allocation6], 4
          %s161 = int_to_ptr.vmem [resolvable:$true] %s160
          %163 = dma.hbm_to_vmem [thread:$0]  %s159, 128, %s161, [#allocation7]
        $region20: #{tpu_custom_call.1} parent=11 // pred_fallthru
          _
      $region12: #{tpu_custom_call.1} parent=5 // pred_fallthru
        _
      %p164 = scmp.lt.s32.totalorder %s17, 2
      // Predicated region
      $region21: #{tpu_custom_call.1} parent=5 // pred_check
        %p165 = pneg %p164
      $region22: #{tpu_custom_call.1} parent=5 // pred_check_branch
        %167 = sbr.rel (%p165) target = $region24
      $region23: #{tpu_custom_call.1} parent=5 // pred_region
        // Predicated region
        $region25: #{tpu_custom_call.1} parent=23 // pred_check
          %p168 = pneg %p72
        $region26: #{tpu_custom_call.1} parent=23 // pred_check_branch
          %170 = sbr.rel (%p168) target = $region28
        $region27: #{tpu_custom_call.1} parent=23 // pred_region
          %s171 = sand.u32 %s62, 1
          %s172 = scalar_lea.sflag [#allocation4], %s171
          %s173 = sand.u32 %s62, 1
          %s174 = smul.addr %s173, 8
          %s175 = scalar_lea.vmem [#allocation3], %s174
          %177 = vsyncadd %s172, 0
          %s178 = sadd.s32 %s24, %s25
          %s179 = smul.addr %s178, 8
          %s180 = scalar_lea.hbm %s1, %s179
          %s182 = sshll.u32 %s180, 4
          %s183 = int_to_ptr.hbm [resolvable:$true] %s182
          %s184 = sshll.u32 %s175, 4
          %s185 = int_to_ptr.vmem [resolvable:$true] %s184
          %187 = dma.hbm_to_vmem [thread:$0]  %s183, 128, %s185, %s172
        $region28: #{tpu_custom_call.1} parent=23 // pred_fallthru
          _
      $region24: #{tpu_custom_call.1} parent=5 // pred_fallthru
        _
      %p188 = scmp.le.s32.totalorder 1, %s17
      %p189 = scmp.lt.s32.totalorder %s17, 3
      %p190 = pnand %p188, %p189
      %p191 = pneg %p190
      // Predicated region
      $region29: #{tpu_custom_call.1} parent=5 // pred_check
        _
      $region30: #{tpu_custom_call.1} parent=5 // pred_check_branch
        %193 = sbr.rel (%p190) target = $region32
      $region31: #{tpu_custom_call.1} parent=5 // pred_region
        %s194 = ssub.s32 %s17, 1
        %s195 = sand.u32 %s65, 1
        %s196 = scalar_lea.sflag [#allocation4], %s195
        %s197 = sand.u32 %s65, 1
        %s198 = smul.addr %s197, 8
        %s199 = scalar_lea.vmem [#allocation3], %s198
        // Predicated region
        $region33: #{tpu_custom_call.1} parent=31 // pred_check
          %p200 = pneg %p78
        $region34: #{tpu_custom_call.1} parent=31 // pred_check_branch
          %202 = sbr.rel (%p200) target = $region36
        $region35: #{tpu_custom_call.1} parent=31 // pred_region
          %204 = dma.done %s196, 128
        $region36: #{tpu_custom_call.1} parent=31 // pred_fallthru
          _
        // Predicated region
        $region37: #{tpu_custom_call.1} parent=31 // pred_check
          %p205 = pneg %p104
        $region38: #{tpu_custom_call.1} parent=31 // pred_check_branch
          %207 = sbr.rel (%p205) target = $region40
        $region39: #{tpu_custom_call.1} parent=31 // pred_region
          %209 = dma.done [#allocation7], 128
        $region40: #{tpu_custom_call.1} parent=31 // pred_fallthru
          _
        %p210 = pneg %p50
        %p211 = pneg %p47
        %s212 = sand.u32 %s65, 1
        %s213 = scalar_lea.sflag [#allocation4], %s212
        %s214 = sand.u32 %s65, 1
        %s215 = smul.addr %s214, 8
        %s216 = scalar_lea.vmem [#allocation3], %s215
        %p217 = pneg %p78
        %p218 = pneg %p75
        %p219 = pneg %p104
        %p220 = pneg %p101
        %p221 = pneg %p132
        %p222 = pneg %p129
        %s223 = sand.u32 %s119, 1
        %s224 = scalar_lea.sflag [#allocation5], %s223
        %s225 = sand.u32 %s119, 1
        %s226 = smul.addr %s225, 8
        %s227 = scalar_lea.vmem [#allocation8], %s226
        %v228 = vld [vmem:[%s199] sm:$0xff]
        %v229 = vmul.f32 %v228, 5.656854
        %v230 = vld [vmem:[#allocation6] sm:$0xff]
        %v231 = vadd.f32 %v229, %v230
        %s232 = smul.u32 %s27, 8
        %s233 = smul.u32 %s26, 8
        %s234 = sadd.s32 %s232, %s233
        %v235 = vlaneseq
        %v236 = vshrl.u32 %v235, 7
        %v237 = vstv %s234
        %v238 = vadd.s32 %v236, %v237
        %v239 = vlaneseq
        %v240 = vand.u32 %v239, 127
        %v241 = vmul.u32 %v238, 32
        %v242 = vadd.s32 %v241, %v240
        %s243 = sld [smem:[#allocation2]]
        %s244 = sadd.s32 %s243, 17
        %s245 = smul.u32 %s244, 2654435769
        %v246 = vstv %s245
        %v247 = vadd.s32 %v242, %v246
        %v248 = vshrl.u32 %v247, 16
        %v249 = vxor.u32 %v247, %v248
        %v250 = vmul.u32 %v249, 2246822507
        %v251 = vshrl.u32 %v250, 13
        %v252 = vxor.u32 %v250, %v251
        %v253 = vmul.u32 %v252, 3266489909
        %v254 = vshrl.u32 %v253, 16
        %v255 = vxor.u32 %v253, %v254
        %v256 = vand.u32 %v255, 2147483647
        %vm257 = vcmp.ge.s32.totalorder %v256, 429496730
        %v258 = vmul.f32 %v231, 1.25
        %v259 = vsel %vm257, %v258, 0.0
        %vm260 = vcmask 261120
        %261 = vst.msk [vmem:[%s227] sm:$0xff] %vm260, %v259
        %s262 = sand.u32 %s119, 1
        %s263 = scalar_lea.sflag [#allocation5], %s262
        %s264 = sand.u32 %s119, 1
        %s265 = smul.addr %s264, 8
        %s266 = scalar_lea.vmem [#allocation8], %s265
        // Predicated region
        $region41: #{tpu_custom_call.1} parent=31 // pred_check
          %p267 = pneg %p129
        $region42: #{tpu_custom_call.1} parent=31 // pred_check_branch
          %269 = sbr.rel (%p267) target = $region44
        $region43: #{tpu_custom_call.1} parent=31 // pred_region
          %271 = vsyncadd %s263, 0
          %s272 = sadd.s32 %s26, %s27
          %s273 = smul.addr %s272, 8
          %s274 = scalar_lea.hbm %s3, %s273
          %s276 = sshll.u32 %s266, 4
          %s277 = int_to_ptr.vmem [resolvable:$true] %s276
          %s278 = sshll.u32 %s274, 4
          %s279 = int_to_ptr.hbm [resolvable:$true] %s278
          %281 = dma.vmem_to_hbm [thread:$0]  %s277, 128, %s279, %s263
        $region44: #{tpu_custom_call.1} parent=31 // pred_fallthru
          _
      $region32: #{tpu_custom_call.1} parent=5 // pred_fallthru
        _
      %p282 = scmp.le.s32.totalorder 2, %s17
      // Predicated region
      $region45: #{tpu_custom_call.1} parent=5 // pred_check
        %p283 = pneg %p282
      $region46: #{tpu_custom_call.1} parent=5 // pred_check_branch
        %285 = sbr.rel (%p283) target = $region48
      $region47: #{tpu_custom_call.1} parent=5 // pred_region
        %s286 = ssub.s32 %s17, 2
        // Predicated region
        $region49: #{tpu_custom_call.1} parent=47 // pred_check
          %p287 = pneg %p135
        $region50: #{tpu_custom_call.1} parent=47 // pred_check_branch
          %289 = sbr.rel (%p287) target = $region52
        $region51: #{tpu_custom_call.1} parent=47 // pred_region
          %s290 = sand.u32 %s120, 1
          %s291 = scalar_lea.sflag [#allocation5], %s290
          %s292 = sand.u32 %s120, 1
          %s293 = smul.addr %s292, 8
          %s294 = scalar_lea.vmem [#allocation8], %s293
          %296 = dma.done %s291, 128
        $region52: #{tpu_custom_call.1} parent=47 // pred_fallthru
          _
      $region48: #{tpu_custom_call.1} parent=5 // pred_fallthru
        _
    $region6: #{tpu_custom_call.1} parent=1 // loop_footer
      %s21 = sadd.s32 1, %s17
    $region7: #{tpu_custom_call.1} parent=1 // loop_footer_branch
      %16 = sbr.rel target = $region3
    $region8: #{tpu_custom_call.1} parent=1 // loop_exit
      _
    %297 = vsyncpa [#allocation4], 1
    %s298 = scalar_lea.sflag [#allocation4], 1
    %299 = vsyncpa %s298, 1
    %300 = vsyncpa [#allocation7], 1
    %301 = vsyncpa [#allocation5], 1
    %s302 = scalar_lea.sflag [#allocation5], 1
    %303 = vsyncpa %s302, 1

</llo_original>
